<compile_context>
chip_gen: v7x
topology: tpu7x:2x2x1
jax: 0.10.0
libtpu: 0.0.40
codegen_flags: <defaults>
</compile_context>

<pallas_src>
import functools

import jax
import jax.numpy as jnp
import numpy as np
from jax.experimental import pallas as pl
from jax.experimental.pallas import tpu as pltpu


def _kld_kernel(idp_ref, pv_ref, act_ref, tgt_ref, sum_ref, cnt_ref,
                *, num_groups, num_classes):
    G = num_groups
    C = num_classes

    # labels for this image, resident for the whole class loop: (1, N) int32
    labels = tgt_ref[...]

    # hoisted small constants (avoid re-broadcasting per class iteration)
    row = jax.lax.broadcasted_iota(jnp.int32, (G, G), 0)
    col = jax.lax.broadcasted_iota(jnp.int32, (G, G), 1)
    eye = row == col
    tri = row < col
    n_pairs_f = jnp.float32(G * (G - 1) // 2)
    neg = jnp.float32(jnp.finfo(jnp.float32).min)

    def class_body(c, carry):
        sum_acc, cnt_acc = carry

        mask = labels == c                                   # (1, N) bool
        cnt = jnp.sum(mask.astype(jnp.float32))
        valid = jnp.logical_and(cnt >= 2.0, pv_ref[c] != 0)

        def compute():
            idp = idp_ref[c]
            act = act_ref[idp].astype(jnp.float32)           # (G, N)

            # masked log-softmax over the class pixels, per group (lane axis)
            a_msk = jnp.where(mask, act, neg)                # (G, N)
            m = jnp.max(a_msk, axis=1, keepdims=True)        # (G, 1)
            e = jnp.exp(a_msk - m)                           # masked lanes -> exactly 0
            s = jnp.sum(e, axis=1, keepdims=True)            # (G, 1), >= 1
            p = e * pl.reciprocal(s, approx=False)           # masked probabilities
            log_p = jnp.where(mask, act - (m + jnp.log(s)), 0.0)

            # cross matrices via MXU: M[a,b] = sum_n p_a[n] * log_p_b[n]
            dims = (((1,), (1,)), ((), ()))
            M = jax.lax.dot_general(p, log_p, dims,
                                    preferred_element_type=jnp.float32)   # (G, G)
            Mt = jax.lax.dot_general(log_p, p, dims,
                                     preferred_element_type=jnp.float32)  # = M.T

            d_row = jnp.sum(jnp.where(eye, M, 0.0), axis=1, keepdims=True)  # (G, 1)
            d_col = jnp.sum(jnp.where(eye, M, 0.0), axis=0, keepdims=True)  # (1, G)

            # symmetric KL: kld[j,k] = 0.5*(M[j,j]+M[k,k]-M[j,k]-M[k,j])
            K = 0.5 * (d_row + d_col - M - Mt)
            return jnp.sum(jnp.where(tri, jnp.exp(-K), 0.0))

        pair_sum = jax.lax.cond(valid, compute, lambda: jnp.float32(0.0))
        pair_cnt = jnp.where(valid, n_pairs_f, jnp.float32(0.0))
        return sum_acc + pair_sum, cnt_acc + pair_cnt

    total_sum, total_cnt = jax.lax.fori_loop(
        0, C, class_body, (jnp.float32(0.0), jnp.float32(0.0)))

    sum_ref[...] = jnp.zeros_like(sum_ref) + total_sum
    cnt_ref[...] = jnp.zeros_like(cnt_ref) + total_cnt


class KLDLossGroup:
    """JAX/Pallas port of the PyTorch KLDLossGroup module."""

    def __init__(self, prototype_class_identity, group_class_identity, num_groups):
        self.prototype_class_identity = jnp.asarray(prototype_class_identity, jnp.float32)
        self.group_class_identity = jnp.asarray(group_class_identity, jnp.float32)
        self.num_groups = int(num_groups)

    def __call__(self, list_group_activation, target_labels):
        G = self.num_groups
        B = target_labels.shape[0]
        C = self.prototype_class_identity.shape[1]
        L = len(list_group_activation)

        # glue: stack/transpose activations into the kernel layout [L, B, G, N]
        # TODO(synk): ideally the upstream op produces channel-minor [B, G, N]
        # directly so this extra HBM pass (stack + transpose) disappears.
        acts = jnp.stack(
            [jnp.asarray(a, jnp.float32).reshape(B, -1, G) for a in list_group_activation],
            axis=0,
        )                                                # [L, B, N, G]
        acts = jnp.transpose(acts, (0, 1, 3, 2))         # [L, B, G, N]
        N = acts.shape[-1]

        tgt = target_labels.reshape(B, -1).astype(jnp.int32) - 1   # [B, N], -1 == ignore

        # pad the pixel axis to a multiple of 128 (padded pixels are ignored)
        n_pad = (-N) % 128
        if n_pad:
            acts = jnp.pad(acts, ((0, 0), (0, 0), (0, 0), (0, n_pad)))
            tgt = jnp.pad(tgt, ((0, 0), (0, n_pad)), constant_values=-1)
        Np = N + n_pad
        tgt = tgt.reshape(B, 1, Np)                      # [B, 1, Np]

        # scalar-prefetch tables (SMEM): projection index per class, prototype validity
        id_proj = (jnp.argmax(self.group_class_identity, axis=0) // G).astype(jnp.int32)      # (C,)
        proto_valid = (jnp.sum(self.prototype_class_identity, axis=0) != 0).astype(jnp.int32)  # (C,)

        grid_spec = pltpu.PrefetchScalarGridSpec(
            num_scalar_prefetch=2,
            grid=(B,),
            in_specs=[
                # whole per-image slab [L, G, Np] resident in VMEM for the class loop
                pl.BlockSpec((L, None, G, Np), lambda b, idp, pv: (0, b, 0, 0)),
                # per-image labels, fetched once per image
                pl.BlockSpec((None, 1, Np), lambda b, idp, pv: (b, 0, 0)),
            ],
            out_specs=[
                pl.BlockSpec((None, 1, 1), lambda b, idp, pv: (b, 0, 0)),
                pl.BlockSpec((None, 1, 1), lambda b, idp, pv: (b, 0, 0)),
            ],
        )

        kernel = functools.partial(_kld_kernel, num_groups=G, num_classes=C)
        sums, cnts = pl.pallas_call(
            kernel,
            grid_spec=grid_spec,
            out_shape=(
                jax.ShapeDtypeStruct((B, 1, 1), jnp.float32),
                jax.ShapeDtypeStruct((B, 1, 1), jnp.float32),
            ),
            compiler_params=pltpu.CompilerParams(
                dimension_semantics=("parallel",)
            ),
        )(id_proj, proto_valid, acts, tgt)

        total = jnp.sum(sums)
        count = jnp.sum(cnts)
        return jnp.where(count > 0, total / jnp.maximum(count, 1.0), jnp.float32(0.0))


def reference_loss(acts_list, targets, proto_id, group_id, num_groups):
    """Pure numpy mirror of the PyTorch forward (for validation)."""
    B = targets.shape[0]
    tl = targets.reshape(B, -1).astype(np.int64) - 1
    C = proto_id.shape[1]
    klds = []
    for b in range(B):
        for cls in np.unique(tl[b]):
            if cls < 0 or cls >= C:
                continue
            if proto_id[:, cls].sum() == 0:
                continue
            idp = int(np.argmax(group_id[:, cls])) // num_groups
            ga = acts_list[idp].reshape(B, -1, num_groups)
            mask = tl[b] == cls
            logs = []
            for g in range(num_groups):
                v = ga[b, :, g][mask].astype(np.float32)
                mx = v.max()
                v = v - (np.log(np.sum(np.exp(v - mx))) + mx)   # log_softmax
                logs.append(v)
            for j in range(num_groups):
                if len(logs[j]) < 2:
                    continue
                for k in range(j + 1, num_groups):
                    if len(logs[k]) < 2:
                        continue
                    p1, p2 = logs[j], logs[k]
                    kld1 = np.sum(np.exp(p2) * (p2 - p1))
                    kld2 = np.sum(np.exp(p1) * (p1 - p2))
                    klds.append((kld1 + kld2) / 2.0)
    if klds:
        return float(np.mean(np.exp(-np.asarray(klds, np.float64))))
    return 0.0


if __name__ == "__main__":
    B, H, W = 2, 16, 16
    G = 4            # num_groups
    C = 6            # num_classes
    L = 2            # number of group-activation tensors (projections)
    P = 12           # num prototypes

    key = jax.random.PRNGKey(0)
    k_act, k_tgt = jax.random.split(key)

    # deterministic synthetic inputs
    acts = [
        jax.random.normal(jax.random.fold_in(k_act, i), (B, H, W, G), jnp.float32)
        for i in range(L)
    ]
    # labels in [0, C]; 0 becomes -1 (ignore) after the shift
    targets = jax.random.randint(k_tgt, (B, H, W), 0, C + 1, dtype=jnp.int32)

    # deterministic identity matrices (shapes implied by __init__ usage)
    proto = np.zeros((P, C), np.float32)
    for c in range(C - 1):           # class C-1 has no prototypes -> skipped branch
        proto[(2 * c) % P, c] = 1.0
    gci = np.zeros((L * G, C), np.float32)
    for c in range(C):
        gci[(c % L) * G + (c % G), c] = 1.0   # argmax // G == c % L

    loss_mod = KLDLossGroup(proto, gci, G)
    loss = jax.block_until_ready(loss_mod(acts, targets))

    ref = reference_loss(
        [np.asarray(a) for a in acts], np.asarray(targets), proto, gci, G
    )
    assert abs(float(loss) - ref) < 1e-3, (float(loss), ref)
    print("KERNEL_OK")
</pallas_src>

<mosaic_0001>
module attributes {stable_mosaic.version = 11 : i64} {
  func.func @_kld_kernel(%arg0: i32, %arg1: memref<6xi32, #tpu.memory_space<smem>>, %arg2: memref<6xi32, #tpu.memory_space<smem>>, %arg3: memref<2x1x4x256xf32, #tpu.memory_space<vmem>>, %arg4: memref<1x1x256xi32, #tpu.memory_space<vmem>>, %arg5: memref<1x1x1xf32, #tpu.memory_space<vmem>>, %arg6: memref<1x1x1xf32, #tpu.memory_space<vmem>>) attributes {dimension_semantics = [#tpu.dimension_semantics<parallel>], iteration_bounds = array<i64: 2>, scalar_prefetch = 2 : i64, scratch_operands = 0 : i64, tpu.core_type = #tpu.core_type<tc>, window_params = [{transform_indices = @transform_0, window_bounds = array<i64: 2, 1, 4, 256>}, {transform_indices = @transform_1, window_bounds = array<i64: 1, 1, 256>}, {transform_indices = @transform_2, window_bounds = array<i64: 1, 1, 1>}, {transform_indices = @transform_3, window_bounds = array<i64: 1, 1, 1>}]} {
    %c0 = arith.constant 0 : index
    %c0_0 = arith.constant 0 : index
    %c0_1 = arith.constant 0 : index
    %0 = vector.load %arg4[%c0, %c0_0, %c0_1] : memref<1x1x256xi32, #tpu.memory_space<vmem>>, vector<1x1x256xi32>
    %1 = vector.shape_cast %0 : vector<1x1x256xi32> to vector<1x256xi32>
    %2 = tpu.iota {dimensions = array<i32: 0>} : vector<4x4xi32>
    %3 = tpu.iota {dimensions = array<i32: 1>} : vector<4x4xi32>
    %4 = arith.cmpi eq, %2, %3 : vector<4x4xi32>
    %5 = arith.cmpi slt, %2, %3 : vector<4x4xi32>
    %cst = arith.constant -3.40282347E+38 : f32
    %cst_2 = arith.constant 6.000000e+00 : f32
    %cst_3 = arith.constant 0.000000e+00 : f32
    %cst_4 = arith.constant 0.000000e+00 : f32
    %c0_i32 = arith.constant 0 : i32
    %c6_i32 = arith.constant 6 : i32
    %6 = arith.addi %c0_i32, %c6_i32 : i32
    %c1_i32 = arith.constant 1 : i32
    %7:2 = scf.for %arg7 = %c0_i32 to %6 step %c1_i32 iter_args(%arg8 = %cst_3, %arg9 = %cst_4) -> (f32, f32)  : i32 {
      %20 = vector.broadcast %arg7 : i32 to vector<1x256xi32>
      %21 = arith.cmpi eq, %1, %20 : vector<1x256xi32>
      %22 = arith.extui %21 : vector<1x256xi1> to vector<1x256xi32>
      %23 = arith.sitofp %22 : vector<1x256xi32> to vector<1x256xf32>
      %24 = vector.shape_cast %23 : vector<1x256xf32> to vector<1x1x256xf32>
      %cst_14 = arith.constant dense<0.000000e+00> : vector<1xf32>
      %25 = vector.multi_reduction <add>, %24, %cst_14 [1, 2] : vector<1x1x256xf32> to vector<1xf32>
      %26 = vector.shape_cast %25 : vector<1xf32> to vector<1x1x1xf32>
      %27 = vector.extract %26[0, 0, 0] : f32 from vector<1x1x1xf32>
      %cst_15 = arith.constant 2.000000e+00 : f32
      %28 = arith.cmpf oge, %27, %cst_15 : f32
      %29 = arith.index_cast %arg7 : i32 to index
      %30 = memref.load %arg2[%29] : memref<6xi32, #tpu.memory_space<smem>>
      %c0_i32_16 = arith.constant 0 : i32
      %31 = arith.cmpi ne, %30, %c0_i32_16 : i32
      %32 = arith.andi %28, %31 : i1
      %33 = arith.extui %32 : i1 to i32
      %c0_i32_17 = arith.constant 0 : i32
      %34 = arith.cmpi ne, %33, %c0_i32_17 : i32
      %35 = scf.if %34 -> (f32) {
        %39 = arith.index_cast %arg7 : i32 to index
        %40 = memref.load %arg1[%39] : memref<6xi32, #tpu.memory_space<smem>>
        %41 = arith.index_cast %40 : i32 to index
        %c0_19 = arith.constant 0 : index
        %c0_20 = arith.constant 0 : index
        %c0_21 = arith.constant 0 : index
        %42 = vector.load %arg3[%41, %c0_19, %c0_20, %c0_21] : memref<2x1x4x256xf32, #tpu.memory_space<vmem>>, vector<1x1x4x256xf32>
        %43 = vector.shape_cast %42 : vector<1x1x4x256xf32> to vector<4x256xf32>
        %44 = vector.shape_cast %21 : vector<1x256xi1> to vector<1x256xi1>
        %45 = vector.broadcast %44 : vector<1x256xi1> to vector<4x256xi1>
        %46 = vector.broadcast %cst : f32 to vector<4x256xf32>
        %47 = arith.select %45, %43, %46 : vector<4x256xi1>, vector<4x256xf32>
        %cst_22 = arith.constant dense<0xFF800000> : vector<4xf32>
        %48 = vector.multi_reduction <maximumf>, %47, %cst_22 [1] : vector<4x256xf32> to vector<4xf32>
        %49 = vector.shape_cast %48 : vector<4xf32> to vector<4x1xf32>
        %50 = vector.broadcast %49 : vector<4x1xf32> to vector<4x256xf32>
        %51 = arith.subf %47, %50 : vector<4x256xf32>
        %52 = math.exp %51 : vector<4x256xf32>
        %cst_23 = arith.constant dense<0.000000e+00> : vector<4xf32>
        %53 = vector.multi_reduction <add>, %52, %cst_23 [1] : vector<4x256xf32> to vector<4xf32>
        %54 = vector.shape_cast %53 : vector<4xf32> to vector<4x1xf32>
        %55 = tpu.reciprocal %54 : vector<4x1xf32> -> vector<4x1xf32>
        %56 = vector.broadcast %55 : vector<4x1xf32> to vector<4x256xf32>
        %57 = arith.mulf %52, %56 : vector<4x256xf32>
        %58 = math.log %54 : vector<4x1xf32>
        %59 = arith.addf %49, %58 : vector<4x1xf32>
        %60 = vector.broadcast %59 : vector<4x1xf32> to vector<4x256xf32>
        %61 = arith.subf %43, %60 : vector<4x256xf32>
        %cst_24 = arith.constant 0.000000e+00 : f32
        %62 = vector.shape_cast %21 : vector<1x256xi1> to vector<1x256xi1>
        %63 = vector.broadcast %62 : vector<1x256xi1> to vector<4x256xi1>
        %64 = vector.broadcast %cst_24 : f32 to vector<4x256xf32>
        %65 = arith.select %63, %61, %64 : vector<4x256xi1>, vector<4x256xf32>
        %cst_25 = arith.constant dense<0.000000e+00> : vector<4x4xf32>
        %66 = tpu.matmul %57, %65, %cst_25 {dimension_numbers = #tpu.dot_dimension_numbers<[1], [1], [0], [0], [0, 0, 1, 0], [], []>} : vector<4x256xf32>, vector<4x256xf32>, vector<4x4xf32> -> vector<4x4xf32>
        %cst_26 = arith.constant dense<0.000000e+00> : vector<4x4xf32>
        %67 = tpu.matmul %65, %57, %cst_26 {dimension_numbers = #tpu.dot_dimension_numbers<[1], [1], [0], [0], [0, 0, 1, 0], [], []>} : vector<4x256xf32>, vector<4x256xf32>, vector<4x4xf32> -> vector<4x4xf32>
        %cst_27 = arith.constant 0.000000e+00 : f32
        %68 = vector.broadcast %cst_27 : f32 to vector<4x4xf32>
        %69 = arith.select %4, %66, %68 : vector<4x4xi1>, vector<4x4xf32>
        %cst_28 = arith.constant dense<0.000000e+00> : vector<4xf32>
        %70 = vector.multi_reduction <add>, %69, %cst_28 [1] : vector<4x4xf32> to vector<4xf32>
        %71 = vector.shape_cast %70 : vector<4xf32> to vector<4x1xf32>
        %cst_29 = arith.constant 0.000000e+00 : f32
        %72 = vector.broadcast %cst_29 : f32 to vector<4x4xf32>
        %73 = arith.select %4, %66, %72 : vector<4x4xi1>, vector<4x4xf32>
        %cst_30 = arith.constant dense<0.000000e+00> : vector<4xf32>
        %74 = vector.multi_reduction <add>, %73, %cst_30 [0] : vector<4x4xf32> to vector<4xf32>
        %75 = vector.shape_cast %74 : vector<4xf32> to vector<1x4xf32>
        %76 = vector.broadcast %71 : vector<4x1xf32> to vector<4x4xf32>
        %77 = vector.broadcast %75 : vector<1x4xf32> to vector<4x4xf32>
        %78 = arith.addf %76, %77 : vector<4x4xf32>
        %79 = arith.subf %78, %66 : vector<4x4xf32>
        %80 = arith.subf %79, %67 : vector<4x4xf32>
        %cst_31 = arith.constant 5.000000e-01 : f32
        %81 = vector.broadcast %cst_31 : f32 to vector<4x4xf32>
        %82 = arith.mulf %81, %80 : vector<4x4xf32>
        %cst_32 = arith.constant 0.000000e+00 : f32
        %83 = vector.broadcast %cst_32 : f32 to vector<4x4xf32>
        %84 = arith.subf %83, %82 : vector<4x4xf32>
        %85 = math.exp %84 : vector<4x4xf32>
        %cst_33 = arith.constant 0.000000e+00 : f32
        %86 = vector.broadcast %cst_33 : f32 to vector<4x4xf32>
        %87 = arith.select %5, %85, %86 : vector<4x4xi1>, vector<4x4xf32>
        %88 = vector.shape_cast %87 : vector<4x4xf32> to vector<1x4x4xf32>
        %cst_34 = arith.constant dense<0.000000e+00> : vector<1xf32>
        %89 = vector.multi_reduction <add>, %88, %cst_34 [1, 2] : vector<1x4x4xf32> to vector<1xf32>
        %90 = vector.shape_cast %89 : vector<1xf32> to vector<1x1x1xf32>
        %91 = vector.extract %90[0, 0, 0] : f32 from vector<1x1x1xf32>
        scf.yield %91 : f32
      } else {
        %cst_19 = arith.constant 0.000000e+00 : f32
        scf.yield %cst_19 : f32
      }
      %cst_18 = arith.constant 0.000000e+00 : f32
      %36 = arith.select %32, %cst_2, %cst_18 : f32
      %37 = arith.addf %arg8, %35 : f32
      %38 = arith.addf %arg9, %36 : f32
      scf.yield %37, %38 : f32, f32
    }
    %c6_i32_5 = arith.constant 6 : i32
    %cst_6 = arith.constant 0.000000e+00 : f32
    %8 = vector.broadcast %cst_6 : f32 to vector<1x1xf32>
    %9 = vector.broadcast %7#0 : f32 to vector<1x1xf32>
    %10 = arith.addf %8, %9 : vector<1x1xf32>
    %c0_7 = arith.constant 0 : index
    %c0_8 = arith.constant 0 : index
    %c0_9 = arith.constant 0 : index
    %11 = vector.load %arg5[%c0_7, %c0_8, %c0_9] : memref<1x1x1xf32, #tpu.memory_space<vmem>>, vector<1x1x1xf32>
    %12 = vector.shape_cast %11 : vector<1x1x1xf32> to vector<1x1xf32>
    %13 = vector.shape_cast %10 : vector<1x1xf32> to vector<1x1x1xf32>
    tpu.vector_store %arg5[%c0_7, %c0_8, %c0_9], %13 {strides = array<i32>} : memref<1x1x1xf32, #tpu.memory_space<vmem>>, vector<1x1x1xf32>,
    %cst_10 = arith.constant 0.000000e+00 : f32
    %14 = vector.broadcast %cst_10 : f32 to vector<1x1xf32>
    %15 = vector.broadcast %7#1 : f32 to vector<1x1xf32>
    %16 = arith.addf %14, %15 : vector<1x1xf32>
    %c0_11 = arith.constant 0 : index
    %c0_12 = arith.constant 0 : index
    %c0_13 = arith.constant 0 : index
    %17 = vector.load %arg6[%c0_11, %c0_12, %c0_13] : memref<1x1x1xf32, #tpu.memory_space<vmem>>, vector<1x1x1xf32>
    %18 = vector.shape_cast %17 : vector<1x1x1xf32> to vector<1x1xf32>
    %19 = vector.shape_cast %16 : vector<1x1xf32> to vector<1x1x1xf32>
    tpu.vector_store %arg6[%c0_11, %c0_12, %c0_13], %19 {strides = array<i32>} : memref<1x1x1xf32, #tpu.memory_space<vmem>>, vector<1x1x1xf32>,
    return
  }
  func.func @transform_0(%arg0: i32, %arg1: memref<6xi32, #tpu.memory_space<smem>>, %arg2: memref<6xi32, #tpu.memory_space<smem>>) -> (i32, i32, i32, i32) {
    %c0_i32 = arith.constant 0 : i32
    %c0_i32_0 = arith.constant 0 : i32
    %c0_i32_1 = arith.constant 0 : i32
    %c0_i32_2 = arith.constant 0 : i32
    return %c0_i32, %arg0, %c0_i32_0, %c0_i32_1 : i32, i32, i32, i32
  }
  func.func @transform_1(%arg0: i32, %arg1: memref<6xi32, #tpu.memory_space<smem>>, %arg2: memref<6xi32, #tpu.memory_space<smem>>) -> (i32, i32, i32) {
    %c0_i32 = arith.constant 0 : i32
    %c0_i32_0 = arith.constant 0 : i32
    %c0_i32_1 = arith.constant 0 : i32
    return %arg0, %c0_i32, %c0_i32_0 : i32, i32, i32
  }
  func.func @transform_2(%arg0: i32, %arg1: memref<6xi32, #tpu.memory_space<smem>>, %arg2: memref<6xi32, #tpu.memory_space<smem>>) -> (i32, i32, i32) {
    %c0_i32 = arith.constant 0 : i32
    %c0_i32_0 = arith.constant 0 : i32
    %c0_i32_1 = arith.constant 0 : i32
    return %arg0, %c0_i32, %c0_i32_0 : i32, i32, i32
  }
  func.func @transform_3(%arg0: i32, %arg1: memref<6xi32, #tpu.memory_space<smem>>, %arg2: memref<6xi32, #tpu.memory_space<smem>>) -> (i32, i32, i32) {
    %c0_i32 = arith.constant 0 : i32
    %c0_i32_0 = arith.constant 0 : i32
    %c0_i32_1 = arith.constant 0 : i32
    return %arg0, %c0_i32, %c0_i32_0 : i32, i32, i32
  }
}

</mosaic_0001>

<llo_original>
// kernel: tpu_custom_call.1
$region0: #{tpu_custom_call.1}
  #allocation0 [shape = 'u32[]', space=smem, size = 0x4, offset = 0x4, fixed_abs, tag = 'smem constant byte address 0x4 - core index']
  #allocation1 [shape = 'u32[144,128]{1,0:T(1,128)}', space=vmem, size = 0x12000, scoped, tag = 'internal scratch']
  #allocation2 [shape = 's32[1]{0}', space=sflag, size = 0x4, scoped, tag = 'scoped memory for tpu_custom_call.1']
  #allocation3 [shape = 'u8[512]{0}', space=smem, size = 0x200, scoped, tag = 'prefetched SMEM operand 0']
  #allocation4 [shape = 'u8[512]{0}', space=smem, size = 0x200, scoped, tag = 'prefetched SMEM operand 1']
  %s0 = inlined_call_operand.hbm [shape: s32[6], index: 0, kind: input, shape index: {}]
  %s1 = inlined_call_operand.vmem [shape: s32[6], index: 1, kind: input, shape index: {}]
  %s2 = inlined_call_operand.hbm [shape: f32[2,2,4,256], index: 2, kind: input, shape index: {}]
  %s3 = inlined_call_operand.vmem [shape: s32[2,1,256], index: 3, kind: input, shape index: {}]
  %s4 = inlined_call_operand.vmem [shape: f32[2,1,1], index: 4, kind: output, shape index: {0}]
  %s5 = inlined_call_operand.vmem [shape: f32[2,1,1], index: 5, kind: output, shape index: {1}]
  %6 = xla_tuple %s4, %s5
  %s7 = sld [smem:[#allocation0]]
  $region68: #{tpu_custom_call.1} parent=0
    _
  %s9 = ssub.s32 1, %s7
  %s10 = scalar_select 0, %s9, %s7
  %12 = dma.hbm_to_smem %s0, 16, [#allocation3], [#allocation2]
  %s13 = sshll.u32 %s1, 4
  %s14 = int_to_ptr.vmem [resolvable:$true] %s13
  %16 = dma.vmem_to_smem %s14, 16, [#allocation4], [#allocation2]
  %17 = dma.done [#allocation2], 32
  %18 = sfence
  $region1: #{tpu_custom_call.1} parent=0
    #allocation5 [shape = 'u8[16384]{0}', space=vmem, size = 0x4000, scoped, tag = 'input window, operand 2']
    #allocation6 [shape = 's32[2]{0}', space=sflag, size = 0x8, scoped, tag = 'scoped memory for tpu_custom_call.1']
    %19 = vsyncpa [#allocation6], 0
    %s20 = scalar_lea.sflag [#allocation6], 1
    %21 = vsyncpa %s20, 0
    loop: start=0, step=1, limit=4
    $region2: #{tpu_custom_call.1} parent=1 // loop_pre_header
      _
    $region3: #{tpu_custom_call.1} parent=1 // loop_header
      %s23 = sphi 0, %s27
      %p24 = scmp.ge.s32.totalorder %s23, 4
      %s33 = sphi 0, %s35
      %s36 = sphi 0, %s33
      %s37 = sphi 0, %s36
      %s53 = sphi 0, %s37
      %s59 = sphi 0, %s61
      %s62 = sphi 0, %s59
      %s63 = sphi 0, %s62
      %s79 = sphi 0, %s63
      %s85 = sphi 0, %s87
      %s88 = sphi 0, %s85
      %s89 = sphi 0, %s88
      %s105 = sphi 0, %s89
      %s111 = sphi 0, %s113
      %s114 = sphi 0, %s111
      %s115 = sphi 0, %s114
      %s131 = sphi 0, %s115
    $region4: #{tpu_custom_call.1} parent=1 // loop_header_branch
      %26 = sbr.rel (%p24) target = $region8
    $region5: #{tpu_custom_call.1} parent=1 // loop_body
      %s28 = ssub.s32 %s23, 1
      %s29 = ssub.s32 %s23, 2
      %s30 = sadd.s32 %s23, 1
      %s31 = ssub.s32 %s23, %s30
      %p32 = scmp.eq.s32.totalorder %s31, 0
      %s34 = sadd.s32 %s33, 1
      %s35 = scalar_select %p32, %s33, %s34
      %p38 = pneg %p32
      %p39 = scmp.eq.s32.totalorder %s23, 1
      %p40 = por %p38, %p39
      %p41 = scmp.ne.s32.totalorder %s33, %s36
      %p42 = scmp.eq.s32.totalorder %s23, 0
      %p43 = por %p41, %p42
      %p44 = scmp.ne.s32.totalorder %s33, %s36
      %p45 = scmp.eq.s32.totalorder %s28, 1
      %p46 = por %p44, %p45
      %p47 = scmp.ne.s32.totalorder %s36, %s37
      %p48 = scmp.eq.s32.totalorder %s28, 0
      %p49 = por %p47, %p48
      %p50 = scmp.ne.s32.totalorder %s36, %s37
      %p51 = scmp.eq.s32.totalorder %s29, 1
      %p52 = por %p50, %p51
      %p54 = scmp.ne.s32.totalorder %s37, %s53
      %p55 = scmp.eq.s32.totalorder %s29, 0
      %p56 = por %p54, %p55
      %s57 = ssub.s32 %s23, %s30
      %p58 = scmp.eq.s32.totalorder %s57, 0
      %s60 = sadd.s32 %s59, 1
      %s61 = scalar_select %p58, %s59, %s60
      %p64 = pneg %p58
      %p65 = scmp.eq.s32.totalorder %s23, 1
      %p66 = por %p64, %p65
      %p67 = scmp.ne.s32.totalorder %s59, %s62
      %p68 = scmp.eq.s32.totalorder %s23, 0
      %p69 = por %p67, %p68
      %p70 = scmp.ne.s32.totalorder %s59, %s62
      %p71 = scmp.eq.s32.totalorder %s28, 1
      %p72 = por %p70, %p71
      %p73 = scmp.ne.s32.totalorder %s62, %s63
      %p74 = scmp.eq.s32.totalorder %s28, 0
      %p75 = por %p73, %p74
      %p76 = scmp.ne.s32.totalorder %s62, %s63
      %p77 = scmp.eq.s32.totalorder %s29, 1
      %p78 = por %p76, %p77
      %p80 = scmp.ne.s32.totalorder %s63, %s79
      %p81 = scmp.eq.s32.totalorder %s29, 0
      %p82 = por %p80, %p81
      %s83 = ssub.s32 %s23, %s30
      %p84 = scmp.eq.s32.totalorder %s83, 0
      %s86 = sadd.s32 %s85, 1
      %s87 = scalar_select %p84, %s85, %s86
      %p90 = pneg %p84
      %p91 = scmp.eq.s32.totalorder %s23, 1
      %p92 = por %p90, %p91
      %p93 = scmp.ne.s32.totalorder %s85, %s88
      %p94 = scmp.eq.s32.totalorder %s23, 0
      %p95 = por %p93, %p94
      %p96 = scmp.ne.s32.totalorder %s85, %s88
      %p97 = scmp.eq.s32.totalorder %s28, 1
      %p98 = por %p96, %p97
      %p99 = scmp.ne.s32.totalorder %s88, %s89
      %p100 = scmp.eq.s32.totalorder %s28, 0
      %p101 = por %p99, %p100
      %p102 = scmp.ne.s32.totalorder %s88, %s89
      %p103 = scmp.eq.s32.totalorder %s29, 1
      %p104 = por %p102, %p103
      %p106 = scmp.ne.s32.totalorder %s89, %s105
      %p107 = scmp.eq.s32.totalorder %s29, 0
      %p108 = por %p106, %p107
      %s109 = ssub.s32 %s23, %s30
      %p110 = scmp.eq.s32.totalorder %s109, 0
      %s112 = sadd.s32 %s111, 1
      %s113 = scalar_select %p110, %s111, %s112
      %p116 = pneg %p110
      %p117 = scmp.eq.s32.totalorder %s23, 1
      %p118 = por %p116, %p117
      %p119 = scmp.ne.s32.totalorder %s111, %s114
      %p120 = scmp.eq.s32.totalorder %s23, 0
      %p121 = por %p119, %p120
      %p122 = scmp.ne.s32.totalorder %s111, %s114
      %p123 = scmp.eq.s32.totalorder %s28, 1
      %p124 = por %p122, %p123
      %p125 = scmp.ne.s32.totalorder %s114, %s115
      %p126 = scmp.eq.s32.totalorder %s28, 0
      %p127 = por %p125, %p126
      %p128 = scmp.ne.s32.totalorder %s114, %s115
      %p129 = scmp.eq.s32.totalorder %s29, 1
      %p130 = por %p128, %p129
      %p132 = scmp.ne.s32.totalorder %s115, %s131
      %p133 = scmp.eq.s32.totalorder %s29, 0
      %p134 = por %p132, %p133
      %p135 = scmp.le.s32.totalorder 1, %s23
      %p136 = scmp.lt.s32.totalorder %s23, 3
      %p137 = pnand %p135, %p136
      %p138 = pneg %p137
      // Predicated region
      $region9: #{tpu_custom_call.1} parent=5 // pred_check
        _
      $region10: #{tpu_custom_call.1} parent=5 // pred_check_branch
        %140 = sbr.rel (%p137) target = $region12
      $region11: #{tpu_custom_call.1} parent=5 // pred_region
        %s141 = ssub.s32 %s23, 1
      $region12: #{tpu_custom_call.1} parent=5 // pred_fallthru
        _
      %p142 = scmp.lt.s32.totalorder %s23, 2
      // Predicated region
      $region13: #{tpu_custom_call.1} parent=5 // pred_check
        %p143 = pneg %p142
      $region14: #{tpu_custom_call.1} parent=5 // pred_check_branch
        %145 = sbr.rel (%p143) target = $region16
      $region15: #{tpu_custom_call.1} parent=5 // pred_region
        // Predicated region
        $region17: #{tpu_custom_call.1} parent=15 // pred_check
          %p146 = pneg %p43
        $region18: #{tpu_custom_call.1} parent=15 // pred_check_branch
          %148 = sbr.rel (%p146) target = $region20
        $region19: #{tpu_custom_call.1} parent=15 // pred_region
          %s149 = sand.u32 %s33, 1
          %s150 = scalar_lea.sflag [#allocation6], %s149
          %s151 = sand.u32 %s33, 1
          %s152 = smul.addr %s151, 16
          %s153 = scalar_lea.vmem [#allocation5], %s152
          %s155 = ssub.s32 256, 256
          %156 = vsyncadd %s150, %s155
          %s157 = smul.addr %s23, 2
          %s158 = smul.addr %s157, 64
          %s159 = scalar_lea.hbm %s2, %s158
          %s160 = sshll.u32 %s153, 4
          %s161 = int_to_ptr.vmem [resolvable:$true] %s160
          %166 = dma.hbm_to_vmem [thread:$0]  %s159, 256, %s161, %s150, 256, 128, 8
        $region20: #{tpu_custom_call.1} parent=15 // pred_fallthru
          _
        // Predicated region
        $region21: #{tpu_custom_call.1} parent=15 // pred_check
          %p167 = pneg %p69
        $region22: #{tpu_custom_call.1} parent=15 // pred_check_branch
          %169 = sbr.rel (%p167) target = $region24
        $region23: #{tpu_custom_call.1} parent=15 // pred_region
          %p170 = scmp.lt.s32.totalorder %s23, 1
          %s171 = scalar_select %p170, %s23, 1
          %s172 = smul.addr %s171, 2
          %s173 = scalar_lea.vmem %s3, %s172
        $region24: #{tpu_custom_call.1} parent=15 // pred_fallthru
          _
      $region16: #{tpu_custom_call.1} parent=5 // pred_fallthru
        _
      %p174 = scmp.le.s32.totalorder 1, %s23
      %p175 = scmp.lt.s32.totalorder %s23, 3
      %p176 = pnand %p174, %p175
      %p177 = pneg %p176
      // Predicated region
      $region25: #{tpu_custom_call.1} parent=5 // pred_check
        _
      $region26: #{tpu_custom_call.1} parent=5 // pred_check_branch
        %179 = sbr.rel (%p176) target = $region28
      $region27: #{tpu_custom_call.1} parent=5 // pred_region
        %s180 = ssub.s32 %s23, 1
        %s181 = sand.u32 %s36, 1
        %s182 = scalar_lea.sflag [#allocation6], %s181
        %s183 = sand.u32 %s36, 1
        %s184 = smul.addr %s183, 16
        %s185 = scalar_lea.vmem [#allocation5], %s184
        // Predicated region
        $region29: #{tpu_custom_call.1} parent=27 // pred_check
          %p186 = pneg %p49
        $region30: #{tpu_custom_call.1} parent=27 // pred_check_branch
          %188 = sbr.rel (%p186) target = $region32
        $region31: #{tpu_custom_call.1} parent=27 // pred_region
          %189 = dma.done %s182, 256
        $region32: #{tpu_custom_call.1} parent=27 // pred_fallthru
          _
        %s190 = sand.u32 %s36, 1
        %s191 = scalar_lea.sflag [#allocation6], %s190
        %s192 = sand.u32 %s36, 1
        %s193 = smul.addr %s192, 16
        %s194 = scalar_lea.vmem [#allocation5], %s193
        %p195 = pneg %p49
        %p196 = pneg %p46
        %p197 = scmp.lt.s32.totalorder %s28, 1
        %s198 = scalar_select %p197, %s28, 1
        %s199 = smul.addr %s198, 2
        %s200 = scalar_lea.vmem %s3, %s199
        %p201 = pneg %p75
        %p202 = pneg %p72
        %p203 = pneg %p101
        %p204 = pneg %p98
        %p205 = scmp.lt.s32.totalorder %s28, 1
        %s206 = scalar_select %p205, %s28, 1
        %s207 = scalar_lea.vmem %s4, %s206
        %p208 = pneg %p127
        %p209 = pneg %p124
        %p210 = scmp.lt.s32.totalorder %s28, 1
        %s211 = scalar_select %p210, %s28, 1
        %s212 = scalar_lea.vmem %s5, %s211
        %p213 = scmp.lt.s32.totalorder %s28, 1
        %s214 = scalar_select %p213, %s28, 1
        %s215 = smul.addr %s214, 2
        %s216 = scalar_lea.vmem %s3, %s215
        %p217 = scmp.lt.s32.totalorder %s28, 1
        %s218 = scalar_select %p217, %s28, 1
        %s219 = scalar_lea.vmem %s4, %s218
        %p220 = scmp.lt.s32.totalorder %s28, 1
        %s221 = scalar_select %p220, %s28, 1
        %s222 = scalar_lea.vmem %s5, %s221
        %v223 = vld [vmem:[%s216] sm:$0x3]
        %v224 = vlaneseq
        %v225 = vshrl.u32 %v224, 7
        %v226 = vlaneseq
        %v227 = vand.u32 %v226, 127
        %vm228 = vcmp.eq.s32.totalorder %v225, %v227
        %vm229 = vcmp.lt.s32.totalorder %v225, %v227
        loop: start=0, step=1, limit=6
        $region33: #{tpu_custom_call.1} parent=27 // loop_pre_header
          _
        $region34: #{tpu_custom_call.1} parent=27 // loop_header
          %s231 = sphi 0, %s235
          %p232 = scmp.ge.s32.totalorder %s231, 6
          %s236 = sphi 0.0, %s506
          %s237 = sphi 0.0, %s507
        $region35: #{tpu_custom_call.1} parent=27 // loop_header_branch
          %234 = sbr.rel (%p232) target = $region39
        $region36: #{tpu_custom_call.1} parent=27 // loop_body
          %v238 = vstv %s231
          %vm239 = vcmp.eq.s32.totalorder %v223, %v238
          %v240 = vsel %vm239, 1, 0
          %v241 = vcvt.s32.f32 %v240
          %v243 = vlaneseq
          %v244 = vshrl.u32 %v243, 7
          %v245 = vsub.s32 0, %v244
          %v246 = vrot.slane %v241, %v245
          %v247 = vlaneseq
          %v248 = vshrl.u32 %v247, 7
          %v249 = vsub.s32 1, %v248
          %v250 = vrot.slane %v241, %v249
          %vm253 = vcmask 1040384
          %v254 = vsel %vm253, %v246, 0.0
          %v255 = vsel %vm253, %v250, 0.0
          %v256 = vadd.f32 %v254, %v255
          %257 = vadd.xlane.f32.xlu0 %v256
          %v258 = vpop.xlane.xlu0 %257
          %v259 = vrot.slane %v258, 4
          %v260 = vadd.f32 %v258, %v259
          %v261 = vrot.slane %v260, 2
          %v262 = vadd.f32 %v260, %v261
          %v263 = vrot.slane %v262, 1
          %v264 = vadd.f32 %v262, %v263
          %s265 = vtos %v264
          %p266 = scmp.ge.f32.partialorder %s265, 2.0
          %s267 = sld [smem:[#allocation4 + %s231]]
          %p268 = scmp.ne.s32.totalorder %s267, 0
          %p269 = pnand %p266, %p268
          %p270 = pneg %p269
          // Predicated region
          $region40: #{tpu_custom_call.1} parent=36 // pred_check
            _
          $region41: #{tpu_custom_call.1} parent=36 // pred_check_branch
            %272 = sbr.rel (%p269) target = $region43
          $region42: #{tpu_custom_call.1} parent=36 // pred_region
            %s273 = sld [smem:[#allocation3 + %s231]]
            %s274 = smul.u32 %s273, 2
            %s275 = smul.addr %s274, 4
            %s276 = scalar_lea.vmem %s185, %s275 [#allocation5]
            %v277 = vld [vmem:[%s276] sm:$0xff]
            %v278 = vlaneseq
            %v279 = vshrl.u32 %v278, 7
            %v280 = vsub.s32 0, %v279
            %v281 = vrot.slane %v240, %v280
            %v282 = vlaneseq
            %v283 = vshrl.u32 %v282, 7
            %v284 = vsub.s32 1, %v283
            %v285 = vrot.slane %v240, %v284
            %vm286 = vcmp.eq.s32.totalorder %v281, 1
            %vm287 = vcmp.eq.s32.totalorder %v285, 1
            %v289 = vcombine.high %v277, %v277
            %v291 = vsel %vm286, %v277, -3.4028235e+38
            %v292 = vsel %vm287, %v289, -3.4028235e+38
            %vm293 = vcmask 1043456
            %v294 = vsel %vm293, %v291, -inf
            %v295 = vsel %vm293, %v292, -inf
            %v296 = vmax.f32 %v294, %v295
            %297 = vmax.xlane.f32.xlu0 %v296
            %v298 = vpop.xlane.xlu0 %297
            %v299 = vsub.f32 %v291, %v298
            %v300 = vsub.f32 %v292, %v298
            %v301 = vmul.f32 %v299, 1.442695
            %v302 = vpow.pop %v301
            %v303 = vmul.f32 %v300, 1.442695
            %v304 = vpow.pop %v303
            %v305 = vsel %vm293, %v302, 0.0
            %v306 = vsel %vm293, %v304, 0.0
            %v307 = vadd.f32 %v305, %v306
            %308 = vadd.xlane.f32.xlu0 %v307
            %v309 = vpop.xlane.xlu0 %308
            %v310 = vrcp.pop %v309
            %v311 = vmul.f32 %v302, %v310
            %v312 = vmul.f32 %v304, %v310
            %v313 = vlog2.pop %v309
            %v314 = vmul.f32 %v313, 0.6931472
            %v315 = vadd.f32 %v298, %v314
            %v318 = vunpack.c.l.s4 839922192
            %v319 = vunpack.c.0.s8 %v318
            %v320 = vlaneseq
            %v321 = vshrl.u32 %v320, 7
            %v322 = vsub.s32 %v319, %v321
            %v323 = vrot.slane %v315, %v322
            %v325 = vsub.f32 %v277, %v323
            %v327 = vcombine.high %v325, %v325
            %v329 = vsel %vm286, %v325, 0.0
            %v330 = vsel %vm287, %v327, 0.0
            %331 = vmatprep.subr.mxu0 %v330
            %332 = vmatpush1.xpose.msra.mxu0 %v329
            %333 = vmatprep.subr.mxu0 0.0
            %334 = vmatpush1.xpose.msra.mxu0 0.0
            %335 = vmatprep.subr.mxu0 0.0
            %336 = vmatpush1.xpose.msra.mxu0 0.0
            %337 = vmatprep.subr.mxu0 0.0
            %338 = vmatpush1.xpose.msra.mxu0 0.0
            %339 = vmatprep.subr.mxu0 0.0
            %340 = vmatpush1.xpose.msra.mxu0 0.0
            %341 = vmatprep.subr.mxu0 0.0
            %342 = vmatpush1.xpose.msra.mxu0 0.0
            %343 = vmatprep.subr.mxu0 0.0
            %344 = vmatpush1.xpose.msra.mxu0 0.0
            %345 = vmatprep.subr.mxu0 0.0
            %346 = vmatpush1.xpose.msra.mxu0 0.0
            %347 = vmatprep.subr.mxu0 0.0
            %348 = vmatpush1.xpose.msra.mxu0 0.0
            %349 = vmatprep.subr.mxu0 0.0
            %350 = vmatpush1.xpose.msra.mxu0 0.0
            %351 = vmatprep.subr.mxu0 0.0
            %352 = vmatpush1.xpose.msra.mxu0 0.0
            %353 = vmatprep.subr.mxu0 0.0
            %354 = vmatpush1.xpose.msra.mxu0 0.0
            %355 = vmatprep.subr.mxu0 0.0
            %356 = vmatpush1.xpose.msra.mxu0 0.0
            %357 = vmatprep.subr.mxu0 0.0
            %358 = vmatpush1.xpose.msra.mxu0 0.0
            %359 = vmatprep.subr.mxu0 0.0
            %360 = vmatpush1.xpose.msra.mxu0 0.0
            %361 = vmatprep.subr.mxu0 0.0
            %362 = vmatpush1.xpose.msra.mxu0 0.0
            %363 = vmatprep.subr.mxu0 0.0
            %364 = vmatpush1.xpose.msra.mxu0 0.0
            %365 = vmatprep.subr.mxu0 0.0
            %366 = vmatpush1.xpose.msra.mxu0 0.0
            %367 = vmatprep.subr.mxu0 0.0
            %368 = vmatpush1.xpose.msra.mxu0 0.0
            %369 = vmatprep.subr.mxu0 0.0
            %370 = vmatpush1.xpose.msra.mxu0 0.0
            %371 = vmatprep.subr.mxu0 0.0
            %372 = vmatpush1.xpose.msra.mxu0 0.0
            %373 = vmatprep.subr.mxu0 0.0
            %374 = vmatpush1.xpose.msra.mxu0 0.0
            %375 = vmatprep.subr.mxu0 0.0
            %376 = vmatpush1.xpose.msra.mxu0 0.0
            %377 = vmatprep.subr.mxu0 0.0
            %378 = vmatpush1.xpose.msra.mxu0 0.0
            %379 = vmatprep.subr.mxu0 0.0
            %380 = vmatpush1.xpose.msra.mxu0 0.0
            %381 = vmatprep.subr.mxu0 0.0
            %382 = vmatpush1.xpose.msra.mxu0 0.0
            %383 = vmatprep.subr.mxu0 0.0
            %384 = vmatpush1.xpose.msra.mxu0 0.0
            %385 = vmatprep.subr.mxu0 0.0
            %386 = vmatpush1.xpose.msra.mxu0 0.0
            %387 = vmatprep.subr.mxu0 0.0
            %388 = vmatpush1.xpose.msra.mxu0 0.0
            %389 = vmatprep.subr.mxu0 0.0
            %390 = vmatpush1.xpose.msra.mxu0 0.0
            %391 = vmatprep.subr.mxu0 0.0
            %392 = vmatpush1.xpose.msra.mxu0 0.0
            %393 = vmatprep.subr.mxu0 0.0
            %394 = vmatpush1.xpose.msra.mxu0 0.0
            %395 = vmatprep.mubr.f32.mxu0 %v312
            %396 = vmatmul.mubr.f32.gmra.mrb[0].mxu0 %v311
            %v397 = vpop.f32.mrb[0].mxu0
            %v398 = vadd.f32 0.0, %v397
            %v399 = vpop.f32.mrb[0].mxu0
            %400 = vdwg.mxu0
            %401 = vmatprep.subr.mxu0 %v312
            %402 = vmatpush1.xpose.msra.mxu0 %v311
            %403 = vmatprep.subr.mxu0 0.0
            %404 = vmatpush1.xpose.msra.mxu0 0.0
            %405 = vmatprep.subr.mxu0 0.0
            %406 = vmatpush1.xpose.msra.mxu0 0.0
            %407 = vmatprep.subr.mxu0 0.0
            %408 = vmatpush1.xpose.msra.mxu0 0.0
            %409 = vmatprep.subr.mxu0 0.0
            %410 = vmatpush1.xpose.msra.mxu0 0.0
            %411 = vmatprep.subr.mxu0 0.0
            %412 = vmatpush1.xpose.msra.mxu0 0.0
            %413 = vmatprep.subr.mxu0 0.0
            %414 = vmatpush1.xpose.msra.mxu0 0.0
            %415 = vmatprep.subr.mxu0 0.0
            %416 = vmatpush1.xpose.msra.mxu0 0.0
            %417 = vmatprep.subr.mxu0 0.0
            %418 = vmatpush1.xpose.msra.mxu0 0.0
            %419 = vmatprep.subr.mxu0 0.0
            %420 = vmatpush1.xpose.msra.mxu0 0.0
            %421 = vmatprep.subr.mxu0 0.0
            %422 = vmatpush1.xpose.msra.mxu0 0.0
            %423 = vmatprep.subr.mxu0 0.0
            %424 = vmatpush1.xpose.msra.mxu0 0.0
            %425 = vmatprep.subr.mxu0 0.0
            %426 = vmatpush1.xpose.msra.mxu0 0.0
            %427 = vmatprep.subr.mxu0 0.0
            %428 = vmatpush1.xpose.msra.mxu0 0.0
            %429 = vmatprep.subr.mxu0 0.0
            %430 = vmatpush1.xpose.msra.mxu0 0.0
            %431 = vmatprep.subr.mxu0 0.0
            %432 = vmatpush1.xpose.msra.mxu0 0.0
            %433 = vmatprep.subr.mxu0 0.0
            %434 = vmatpush1.xpose.msra.mxu0 0.0
            %435 = vmatprep.subr.mxu0 0.0
            %436 = vmatpush1.xpose.msra.mxu0 0.0
            %437 = vmatprep.subr.mxu0 0.0
            %438 = vmatpush1.xpose.msra.mxu0 0.0
            %439 = vmatprep.subr.mxu0 0.0
            %440 = vmatpush1.xpose.msra.mxu0 0.0
            %441 = vmatprep.subr.mxu0 0.0
            %442 = vmatpush1.xpose.msra.mxu0 0.0
            %443 = vmatprep.subr.mxu0 0.0
            %444 = vmatpush1.xpose.msra.mxu0 0.0
            %445 = vmatprep.subr.mxu0 0.0
            %446 = vmatpush1.xpose.msra.mxu0 0.0
            %447 = vmatprep.subr.mxu0 0.0
            %448 = vmatpush1.xpose.msra.mxu0 0.0
            %449 = vmatprep.subr.mxu0 0.0
            %450 = vmatpush1.xpose.msra.mxu0 0.0
            %451 = vmatprep.subr.mxu0 0.0
            %452 = vmatpush1.xpose.msra.mxu0 0.0
            %453 = vmatprep.subr.mxu0 0.0
            %454 = vmatpush1.xpose.msra.mxu0 0.0
            %455 = vmatprep.subr.mxu0 0.0
            %456 = vmatpush1.xpose.msra.mxu0 0.0
            %457 = vmatprep.subr.mxu0 0.0
            %458 = vmatpush1.xpose.msra.mxu0 0.0
            %459 = vmatprep.subr.mxu0 0.0
            %460 = vmatpush1.xpose.msra.mxu0 0.0
            %461 = vmatprep.subr.mxu0 0.0
            %462 = vmatpush1.xpose.msra.mxu0 0.0
            %463 = vmatprep.subr.mxu0 0.0
            %464 = vmatpush1.xpose.msra.mxu0 0.0
            %465 = vmatprep.mubr.f32.mxu0 %v330
            %466 = vmatmul.mubr.f32.gmra.mrb[0].mxu0 %v329
            %v467 = vpop.f32.mrb[0].mxu0
            %v468 = vadd.f32 0.0, %v467
            %v469 = vpop.f32.mrb[0].mxu0
            %470 = vdwg.mxu0
            %v471 = vsel %vm228, %v398, 0.0
            %vm472 = vcmask 27648
            %v473 = vsel %vm472, %v471, 0.0
            %474 = vadd.xlane.f32.xlu0 %v473
            %v475 = vpop.xlane.xlu0 %474
            %v476 = vrot.slane %v473, 4
            %v477 = vadd.f32 %v473, %v476
            %v478 = vrot.slane %v477, 2
            %v479 = vadd.f32 %v477, %v478
            %v480 = vrot.slane %v479, 1
            %v481 = vadd.f32 %v479, %v480
            %v482 = vadd.f32 %v475, %v481
            %v483 = vsub.f32 %v482, %v398
            %v484 = vsub.f32 %v483, %v468
            %v485 = vmul.f32 %v484, 0.5
            %v486 = vsub.f32 0.0, %v485
            %v487 = vmul.f32 %v486, 1.442695
            %v488 = vpow.pop %v487
            %v489 = vsel %vm229, %v488, 0.0
            %v490 = vsel %vm472, %v489, 0.0
            %491 = vadd.xlane.f32.xlu0 %v490
            %v492 = vpop.xlane.xlu0 %491
            %v493 = vrot.slane %v492, 4
            %v494 = vadd.f32 %v492, %v493
            %v495 = vrot.slane %v494, 2
            %v496 = vadd.f32 %v494, %v495
            %v497 = vrot.slane %v496, 1
            %v498 = vadd.f32 %v496, %v497
            %s499 = vtos %v498
          $region43: #{tpu_custom_call.1} parent=36 // pred_fallthru
            %s500 = sphi 0, %s499
          // Predicated region
          $region44: #{tpu_custom_call.1} parent=36 // pred_check
            %p501 = pneg %p269
          $region45: #{tpu_custom_call.1} parent=36 // pred_check_branch
            %503 = sbr.rel (%p501) target = $region47
          $region46: #{tpu_custom_call.1} parent=36 // pred_region
            _
          $region47: #{tpu_custom_call.1} parent=36 // pred_fallthru
            %s504 = sphi %s500, 0.0
          %s505 = scalar_select %p270, 6.0, 0.0
          %s506 = sadd.f32 %s236, %s504
          %s507 = sadd.f32 %s237, %s505
        $region37: #{tpu_custom_call.1} parent=27 // loop_footer
          %s235 = sadd.s32 1, %s231
        $region38: #{tpu_custom_call.1} parent=27 // loop_footer_branch
          %230 = sbr.rel target = $region34
        $region39: #{tpu_custom_call.1} parent=27 // loop_exit
          _
        %v508 = vstv %s236
        %v509 = vadd.f32 %v508, 0.0
        %vm510 = vcmask 0
        %511 = vst.msk [vmem:[%s219] sm:$0x1] %vm510, %v509
        %v512 = vstv %s237
        %v513 = vadd.f32 %v512, 0.0
        %514 = vst.msk [vmem:[%s222] sm:$0x1] %vm510, %v513
        %p515 = scmp.lt.s32.totalorder %s28, 1
        %s516 = scalar_select %p515, %s28, 1
        %s517 = scalar_lea.vmem %s4, %s516
        %p518 = scmp.lt.s32.totalorder %s28, 1
        %s519 = scalar_select %p518, %s28, 1
        %s520 = scalar_lea.vmem %s5, %s519
        // Predicated region
        $region48: #{tpu_custom_call.1} parent=27 // pred_check
          %p521 = pneg %p98
        $region49: #{tpu_custom_call.1} parent=27 // pred_check_branch
          %523 = sbr.rel (%p521) target = $region51
        $region50: #{tpu_custom_call.1} parent=27 // pred_region
          _
        $region51: #{tpu_custom_call.1} parent=27 // pred_fallthru
          _
        // Predicated region
        $region52: #{tpu_custom_call.1} parent=27 // pred_check
          %p524 = pneg %p124
        $region53: #{tpu_custom_call.1} parent=27 // pred_check_branch
          %526 = sbr.rel (%p524) target = $region55
        $region54: #{tpu_custom_call.1} parent=27 // pred_region
          _
        $region55: #{tpu_custom_call.1} parent=27 // pred_fallthru
          _
      $region28: #{tpu_custom_call.1} parent=5 // pred_fallthru
        _
      %p527 = scmp.le.s32.totalorder 2, %s23
      // Predicated region
      $region56: #{tpu_custom_call.1} parent=5 // pred_check
        %p528 = pneg %p527
      $region57: #{tpu_custom_call.1} parent=5 // pred_check_branch
        %530 = sbr.rel (%p528) target = $region59
      $region58: #{tpu_custom_call.1} parent=5 // pred_region
        %s531 = ssub.s32 %s23, 2
        // Predicated region
        $region60: #{tpu_custom_call.1} parent=58 // pred_check
          %p532 = pneg %p104
        $region61: #{tpu_custom_call.1} parent=58 // pred_check_branch
          %534 = sbr.rel (%p532) target = $region63
        $region62: #{tpu_custom_call.1} parent=58 // pred_region
          %p535 = scmp.lt.s32.totalorder %s29, 1
          %s536 = scalar_select %p535, %s29, 1
          %s537 = scalar_lea.vmem %s4, %s536
        $region63: #{tpu_custom_call.1} parent=58 // pred_fallthru
          _
        // Predicated region
        $region64: #{tpu_custom_call.1} parent=58 // pred_check
          %p538 = pneg %p130
        $region65: #{tpu_custom_call.1} parent=58 // pred_check_branch
          %540 = sbr.rel (%p538) target = $region67
        $region66: #{tpu_custom_call.1} parent=58 // pred_region
          %p541 = scmp.lt.s32.totalorder %s29, 1
          %s542 = scalar_select %p541, %s29, 1
          %s543 = scalar_lea.vmem %s5, %s542
        $region67: #{tpu_custom_call.1} parent=58 // pred_fallthru
          _
      $region59: #{tpu_custom_call.1} parent=5 // pred_fallthru
        _
    $region6: #{tpu_custom_call.1} parent=1 // loop_footer
      %s27 = sadd.s32 1, %s23
    $region7: #{tpu_custom_call.1} parent=1 // loop_footer_branch
      %22 = sbr.rel target = $region3
    $region8: #{tpu_custom_call.1} parent=1 // loop_exit
      _
    %544 = vsyncpa [#allocation6], 1
    %s545 = scalar_lea.sflag [#allocation6], 1
    %546 = vsyncpa %s545, 1

</llo_original>
